<compile_context>
chip_gen: v7x
topology: tpu7x:2x2x1
jax: 0.10.0
libtpu: 0.0.40
codegen_flags: <defaults>
</compile_context>

<pallas_src>
import jax
import jax.numpy as jnp
from jax.experimental import pallas as pl
from jax.experimental.pallas import tpu as pltpu


_EPS = 1e-5
_LANE = 128
_VMEM_LIMIT = 32 * 1024 * 1024  # explicit scoped-VMEM cap; usage per tile is ~1-4 MiB


def _round_up(x, m):
    return (x + m - 1) // m * m


def _stats_kernel(p_ref, w_ref, part_ref):
    # p_ref : (TILE_M, K)  patch tile (bf16 or f32)
    # w_ref : (K, Cp)      reshaped conv weight (resident across grid)
    # part_ref : (1, 2, Cp) per-tile [sum, sum_of_squares] partials (f32)
    y = jnp.dot(p_ref[...], w_ref[...], preferred_element_type=jnp.float32)  # (TILE_M, Cp)
    part_ref[0, 0:1, :] = jnp.sum(y, axis=0, keepdims=True)
    part_ref[0, 1:2, :] = jnp.sum(y * y, axis=0, keepdims=True)


def _norm_kernel(p_ref, w_ref, scale_ref, shift_ref, o_ref):
    # Recompute the conv tile on the MXU, then folded BN affine (1 FMA) + ReLU.
    y = jnp.dot(p_ref[...], w_ref[...], preferred_element_type=jnp.float32)  # (TILE_M, Cp)
    o_ref[...] = jnp.maximum(y * scale_ref[...] + shift_ref[...], 0.0).astype(o_ref.dtype)


def preconv_forward(x, weight, gamma, beta, *, tile_m=2048,
                    compute_dtype=jnp.bfloat16, output_format="NCHW"):
    """x: (N, C_in, H, W) NCHW; weight: (C_out, C_in, 2, 2); gamma/beta: (C_out,).
    Returns (N, C_out, H//2, W//2) NCHW (or NHWC if output_format == "NHWC")."""
    N, C, H, W = x.shape
    Cout = weight.shape[0]
    Ho, Wo = H // 2, W // 2            # k=2, s=2, p=0 conv floors odd spatial dims
    K = C * 4
    M = N * Ho * Wo
    Cp = _round_up(Cout, _LANE)        # lane-dense output channels

    tile_m = max(8, min(tile_m, _round_up(M, 8)))
    Mp = _round_up(M, tile_m)
    num_tiles = Mp // tile_m

    out_dtype = x.dtype

    # ---- glue: non-overlapping 2x2 patch extraction (exact stride-2/k=2 conv) ----
    x = x[:, :, : 2 * Ho, : 2 * Wo]
    xp = x.astype(compute_dtype).reshape(N, C, Ho, 2, Wo, 2)
    xp = jnp.transpose(xp, (0, 2, 4, 1, 3, 5))            # (N, Ho, Wo, C, kh, kw)
    patches = xp.reshape(M, K)
    if Mp != M:
        patches = jnp.pad(patches, ((0, Mp - M), (0, 0)))  # zero rows: no effect on sums

    w2d = weight.astype(compute_dtype).reshape(Cout, K).T  # (K, Cout)
    if Cp != Cout:
        w2d = jnp.pad(w2d, ((0, 0), (0, Cp - Cout)))
    g = jnp.pad(gamma.astype(jnp.float32), (0, Cp - Cout))
    b = jnp.pad(beta.astype(jnp.float32), (0, Cp - Cout))

    cparams = pltpu.CompilerParams(
        dimension_semantics=("parallel",),
        vmem_limit_bytes=_VMEM_LIMIT,
    )

    # ---- pass 1: per-tile BN partial statistics (fully parallel over M tiles) ----
    partials = pl.pallas_call(
        _stats_kernel,
        out_shape=jax.ShapeDtypeStruct((num_tiles, 2, Cp), jnp.float32),
        grid=(num_tiles,),
        in_specs=[
            pl.BlockSpec((tile_m, K), lambda i: (i, 0)),
            pl.BlockSpec((K, Cp), lambda i: (0, 0)),       # weight stays VMEM-resident
        ],
        out_specs=pl.BlockSpec((1, 2, Cp), lambda i: (i, 0, 0)),
        compiler_params=cparams,
    )(patches, w2d)

    # tiny (num_tiles, 2, Cp) combine + affine fold in plain XLA
    sums = jnp.sum(partials, axis=0)                       # (2, Cp)
    mean = sums[0] / M
    var = jnp.maximum(sums[1] / M - mean * mean, 0.0)      # biased variance (BN train mode)
    inv = jax.lax.rsqrt(var + _EPS)
    scale = (g * inv).reshape(1, Cp)
    shift = (b - mean * g * inv).reshape(1, Cp)

    # ---- pass 2: stream tiles again, matmul + folded affine + ReLU ----
    y = pl.pallas_call(
        _norm_kernel,
        out_shape=jax.ShapeDtypeStruct((Mp, Cp), out_dtype),
        grid=(num_tiles,),
        in_specs=[
            pl.BlockSpec((tile_m, K), lambda i: (i, 0)),
            pl.BlockSpec((K, Cp), lambda i: (0, 0)),
            pl.BlockSpec((1, Cp), lambda i: (0, 0)),
            pl.BlockSpec((1, Cp), lambda i: (0, 0)),
        ],
        out_specs=pl.BlockSpec((tile_m, Cp), lambda i: (i, 0)),
        compiler_params=cparams,
    )(patches, w2d, scale, shift)

    y = y[:M, :Cout].reshape(N, Ho, Wo, Cout)
    if output_format == "NHWC":
        return y
    return jnp.transpose(y, (0, 3, 1, 2))                  # NCHW (PyTorch convention)


def _reference(x, weight, gamma, beta, eps=_EPS):
    # plain-JAX f32 reference (conv -> train-mode BN -> ReLU), NCHW/OIHW
    y = jax.lax.conv_general_dilated(
        x, weight, window_strides=(2, 2), padding="VALID",
        dimension_numbers=("NCHW", "OIHW", "NCHW"))
    mean = jnp.mean(y, axis=(0, 2, 3), keepdims=True)
    var = jnp.mean((y - mean) ** 2, axis=(0, 2, 3), keepdims=True)
    yn = (y - mean) * jax.lax.rsqrt(var + eps)
    yn = yn * gamma.reshape(1, -1, 1, 1) + beta.reshape(1, -1, 1, 1)
    return jnp.maximum(yn, 0.0)


if __name__ == "__main__":
    key = jax.random.PRNGKey(0)
    k_x, k_w, k_g, k_b = jax.random.split(key, 4)

    N, C_in, C_out, H, W = 2, 4, 8, 16, 16

    x = jax.random.normal(k_x, (N, C_in, H, W), dtype=jnp.float32)
    weight = jax.random.normal(k_w, (C_out, C_in, 2, 2), dtype=jnp.float32) * 0.25
    gamma = 1.0 + 0.1 * jax.random.normal(k_g, (C_out,), dtype=jnp.float32)
    beta = 0.1 * jax.random.normal(k_b, (C_out,), dtype=jnp.float32)

    fwd = jax.jit(preconv_forward,
                  static_argnames=("tile_m", "compute_dtype", "output_format"))

    ref = _reference(x, weight, gamma, beta)

    # exact-math check (f32 MXU operands)
    out_f32 = jax.block_until_ready(fwd(x, weight, gamma, beta, compute_dtype=jnp.float32))
    assert out_f32.shape == (N, C_out, H // 2, W // 2), out_f32.shape
    assert jnp.allclose(out_f32, ref, atol=1e-4, rtol=1e-4), \
        float(jnp.max(jnp.abs(out_f32 - ref)))

    # performance path (bf16 MXU operands, f32 accumulation + BN math)
    out = jax.block_until_ready(fwd(x, weight, gamma, beta))
    assert out.shape == (N, C_out, H // 2, W // 2), out.shape
    assert jnp.allclose(out, ref, atol=5e-2, rtol=5e-2), \
        float(jnp.max(jnp.abs(out - ref)))

    print("KERNEL_OK")
</pallas_src>

<mosaic_0001>
module attributes {stable_mosaic.version = 11 : i64} {
  func.func @_norm_kernel(%arg0: i32, %arg1: memref<128x16xf32, #tpu.memory_space<vmem>>, %arg2: memref<16x128xf32, #tpu.memory_space<vmem>>, %arg3: memref<1x128xf32, #tpu.memory_space<vmem>>, %arg4: memref<1x128xf32, #tpu.memory_space<vmem>>, %arg5: memref<128x128xf32, #tpu.memory_space<vmem>>) attributes {dimension_semantics = [#tpu.dimension_semantics<parallel>], iteration_bounds = array<i64: 1>, scalar_prefetch = 0 : i64, scratch_operands = 0 : i64, tpu.core_type = #tpu.core_type<tc>, window_params = [{transform_indices = @transform_0, window_bounds = array<i64: 128, 16>}, {pipeline_mode = #tpu.pipeline_mode<synchronous>, transform_indices = @transform_1, window_bounds = array<i64: 16, 128>}, {pipeline_mode = #tpu.pipeline_mode<synchronous>, transform_indices = @transform_2, window_bounds = array<i64: 1, 128>}, {pipeline_mode = #tpu.pipeline_mode<synchronous>, transform_indices = @transform_3, window_bounds = array<i64: 1, 128>}, {transform_indices = @transform_4, window_bounds = array<i64: 128, 128>}]} {
    %c0 = arith.constant 0 : index
    %c0_0 = arith.constant 0 : index
    %0 = vector.load %arg1[%c0, %c0_0] : memref<128x16xf32, #tpu.memory_space<vmem>>, vector<128x16xf32>
    %c0_1 = arith.constant 0 : index
    %c0_2 = arith.constant 0 : index
    %1 = vector.load %arg2[%c0_1, %c0_2] : memref<16x128xf32, #tpu.memory_space<vmem>>, vector<16x128xf32>
    %cst = arith.constant dense<0.000000e+00> : vector<128x128xf32>
    %2 = tpu.matmul %0, %1, %cst {dimension_numbers = #tpu.dot_dimension_numbers<[1], [0], [0], [1], [0, 0, 1, 1], [], []>} : vector<128x16xf32>, vector<16x128xf32>, vector<128x128xf32> -> vector<128x128xf32>
    %c0_3 = arith.constant 0 : index
    %c0_4 = arith.constant 0 : index
    %3 = vector.load %arg3[%c0_3, %c0_4] : memref<1x128xf32, #tpu.memory_space<vmem>>, vector<1x128xf32>
    %4 = vector.broadcast %3 : vector<1x128xf32> to vector<128x128xf32>
    %5 = arith.mulf %2, %4 : vector<128x128xf32>
    %c0_5 = arith.constant 0 : index
    %c0_6 = arith.constant 0 : index
    %6 = vector.load %arg4[%c0_5, %c0_6] : memref<1x128xf32, #tpu.memory_space<vmem>>, vector<1x128xf32>
    %7 = vector.broadcast %6 : vector<1x128xf32> to vector<128x128xf32>
    %8 = arith.addf %5, %7 : vector<128x128xf32>
    %cst_7 = arith.constant 0.000000e+00 : f32
    %9 = vector.broadcast %cst_7 : f32 to vector<128x128xf32>
    %10 = arith.maximumf %8, %9 : vector<128x128xf32>
    %c0_8 = arith.constant 0 : index
    %c0_9 = arith.constant 0 : index
    %11 = vector.load %arg5[%c0_8, %c0_9] : memref<128x128xf32, #tpu.memory_space<vmem>>, vector<128x128xf32>
    tpu.vector_store %arg5[%c0_8, %c0_9], %10 {strides = array<i32>} : memref<128x128xf32, #tpu.memory_space<vmem>>, vector<128x128xf32>,
    return
  }
  func.func @transform_0(%arg0: i32) -> (i32, i32) {
    %c0_i32 = arith.constant 0 : i32
    %c0_i32_0 = arith.constant 0 : i32
    return %arg0, %c0_i32 : i32, i32
  }
  func.func @transform_1(%arg0: i32) -> (i32, i32) {
    %c0_i32 = arith.constant 0 : i32
    %c0_i32_0 = arith.constant 0 : i32
    %c0_i32_1 = arith.constant 0 : i32
    return %c0_i32, %c0_i32_0 : i32, i32
  }
  func.func @transform_2(%arg0: i32) -> (i32, i32) {
    %c0_i32 = arith.constant 0 : i32
    %c0_i32_0 = arith.constant 0 : i32
    %c0_i32_1 = arith.constant 0 : i32
    return %c0_i32, %c0_i32_0 : i32, i32
  }
  func.func @transform_3(%arg0: i32) -> (i32, i32) {
    %c0_i32 = arith.constant 0 : i32
    %c0_i32_0 = arith.constant 0 : i32
    %c0_i32_1 = arith.constant 0 : i32
    return %c0_i32, %c0_i32_0 : i32, i32
  }
  func.func @transform_4(%arg0: i32) -> (i32, i32) {
    %c0_i32 = arith.constant 0 : i32
    %c0_i32_0 = arith.constant 0 : i32
    return %arg0, %c0_i32 : i32, i32
  }
}

module attributes {stable_mosaic.version = 11 : i64} {
  func.func @_stats_kernel(%arg0: i32, %arg1: memref<128x16xf32, #tpu.memory_space<vmem>>, %arg2: memref<16x128xf32, #tpu.memory_space<vmem>>, %arg3: memref<1x2x128xf32, #tpu.memory_space<vmem>>) attributes {dimension_semantics = [#tpu.dimension_semantics<parallel>], iteration_bounds = array<i64: 1>, scalar_prefetch = 0 : i64, scratch_operands = 0 : i64, tpu.core_type = #tpu.core_type<tc>, window_params = [{transform_indices = @transform_0, window_bounds = array<i64: 128, 16>}, {pipeline_mode = #tpu.pipeline_mode<synchronous>, transform_indices = @transform_1, window_bounds = array<i64: 16, 128>}, {transform_indices = @transform_2, window_bounds = array<i64: 1, 2, 128>}]} {
    %c0 = arith.constant 0 : index
    %c0_0 = arith.constant 0 : index
    %0 = vector.load %arg1[%c0, %c0_0] : memref<128x16xf32, #tpu.memory_space<vmem>>, vector<128x16xf32>
    %c0_1 = arith.constant 0 : index
    %c0_2 = arith.constant 0 : index
    %1 = vector.load %arg2[%c0_1, %c0_2] : memref<16x128xf32, #tpu.memory_space<vmem>>, vector<16x128xf32>
    %cst = arith.constant dense<0.000000e+00> : vector<128x128xf32>
    %2 = tpu.matmul %0, %1, %cst {dimension_numbers = #tpu.dot_dimension_numbers<[1], [0], [0], [1], [0, 0, 1, 1], [], []>} : vector<128x16xf32>, vector<16x128xf32>, vector<128x128xf32> -> vector<128x128xf32>
    %cst_3 = arith.constant dense<0.000000e+00> : vector<128xf32>
    %3 = vector.multi_reduction <add>, %2, %cst_3 [0] : vector<128x128xf32> to vector<128xf32>
    %4 = vector.shape_cast %3 : vector<128xf32> to vector<1x128xf32>
    %c0_4 = arith.constant 0 : index
    %c0_5 = arith.constant 0 : index
    %c0_6 = arith.constant 0 : index
    %5 = vector.load %arg3[%c0_4, %c0_5, %c0_6] : memref<1x2x128xf32, #tpu.memory_space<vmem>>, vector<1x1x128xf32>
    %6 = vector.shape_cast %5 : vector<1x1x128xf32> to vector<1x128xf32>
    %7 = vector.shape_cast %4 : vector<1x128xf32> to vector<1x1x128xf32>
    tpu.vector_store %arg3[%c0_4, %c0_5, %c0_6], %7 {strides = array<i32>} : memref<1x2x128xf32, #tpu.memory_space<vmem>>, vector<1x1x128xf32>,
    %8 = arith.mulf %2, %2 : vector<128x128xf32>
    %cst_7 = arith.constant dense<0.000000e+00> : vector<128xf32>
    %9 = vector.multi_reduction <add>, %8, %cst_7 [0] : vector<128x128xf32> to vector<128xf32>
    %10 = vector.shape_cast %9 : vector<128xf32> to vector<1x128xf32>
    %c0_8 = arith.constant 0 : index
    %c1 = arith.constant 1 : index
    %c0_9 = arith.constant 0 : index
    %11 = vector.load %arg3[%c0_8, %c1, %c0_9] : memref<1x2x128xf32, #tpu.memory_space<vmem>>, vector<1x1x128xf32>
    %12 = vector.shape_cast %11 : vector<1x1x128xf32> to vector<1x128xf32>
    %13 = vector.shape_cast %10 : vector<1x128xf32> to vector<1x1x128xf32>
    tpu.vector_store %arg3[%c0_8, %c1, %c0_9], %13 {strides = array<i32>} : memref<1x2x128xf32, #tpu.memory_space<vmem>>, vector<1x1x128xf32>,
    return
  }
  func.func @transform_0(%arg0: i32) -> (i32, i32) {
    %c0_i32 = arith.constant 0 : i32
    %c0_i32_0 = arith.constant 0 : i32
    return %arg0, %c0_i32 : i32, i32
  }
  func.func @transform_1(%arg0: i32) -> (i32, i32) {
    %c0_i32 = arith.constant 0 : i32
    %c0_i32_0 = arith.constant 0 : i32
    %c0_i32_1 = arith.constant 0 : i32
    return %c0_i32, %c0_i32_0 : i32, i32
  }
  func.func @transform_2(%arg0: i32) -> (i32, i32, i32) {
    %c0_i32 = arith.constant 0 : i32
    %c0_i32_0 = arith.constant 0 : i32
    %c0_i32_1 = arith.constant 0 : i32
    return %arg0, %c0_i32, %c0_i32_0 : i32, i32, i32
  }
}

</mosaic_0001>

<llo_original>
// kernel: preconv_forward.2
$region0: #{preconv_forward.2}
  #allocation0 [shape = 'u32[]', space=smem, size = 0x4, offset = 0x4, fixed_abs, tag = 'smem constant byte address 0x4 - core index']
  #allocation1 [shape = 'u32[144,128]{1,0:T(1,128)}', space=vmem, size = 0x12000, scoped, tag = 'internal scratch']
  %s0 = inlined_call_operand.vmem [shape: f32[128,16], index: 0, kind: input, shape index: {}]
  %s1 = inlined_call_operand.vmem [shape: f32[16,128], index: 1, kind: input, shape index: {}]
  %s2 = inlined_call_operand.vmem [shape: f32[1,2,128], index: 2, kind: output, shape index: {}]
  %s3 = sld [smem:[#allocation0]]
  $region18: #{preconv_forward.2} parent=0
    _
  %s5 = ssub.s32 1, %s3
  %s6 = scalar_select 0, %s5, %s3
  // Predicated region
  $region2: #{preconv_forward.2} parent=0 // pred_check
    _
  $region3: #{preconv_forward.2} parent=0 // pred_check_branch
    %8 = sbr.rel (0) target = $region5
  $region4: #{preconv_forward.2} parent=0 // pred_region
    _
  $region5: #{preconv_forward.2} parent=0 // pred_fallthru
    _
  // Predicated region
  $region6: #{preconv_forward.2} parent=0 // pred_check
    _
  $region7: #{preconv_forward.2} parent=0 // pred_check_branch
    %10 = sbr.rel (0) target = $region9
  $region8: #{preconv_forward.2} parent=0 // pred_region
    _
  $region9: #{preconv_forward.2} parent=0 // pred_fallthru
    _
  %v11 = vld [vmem:[%s0] sm:$0xff]
  %v12 = vld [vmem:[%s0 + $0x8] sm:$0xff]
  %v13 = vld [vmem:[%s0 + $0x10] sm:$0xff]
  %v14 = vld [vmem:[%s0 + $0x18] sm:$0xff]
  %v15 = vld [vmem:[%s0 + $0x20] sm:$0xff]
  %v16 = vld [vmem:[%s0 + $0x28] sm:$0xff]
  %v17 = vld [vmem:[%s0 + $0x30] sm:$0xff]
  %v18 = vld [vmem:[%s0 + $0x38] sm:$0xff]
  %v19 = vld [vmem:[%s0 + $0x40] sm:$0xff]
  %v20 = vld [vmem:[%s0 + $0x48] sm:$0xff]
  %v21 = vld [vmem:[%s0 + $0x50] sm:$0xff]
  %v22 = vld [vmem:[%s0 + $0x58] sm:$0xff]
  %v23 = vld [vmem:[%s0 + $0x60] sm:$0xff]
  %v24 = vld [vmem:[%s0 + $0x68] sm:$0xff]
  %v25 = vld [vmem:[%s0 + $0x70] sm:$0xff]
  %v26 = vld [vmem:[%s0 + $0x78] sm:$0xff]
  %v27 = vld [vmem:[%s1] sm:$0xff]
  %v28 = vld [vmem:[%s1 + $0x8] sm:$0xff]
  %vm29 = vcmask 130048
  %v31 = vsel %vm29, %v11, 0
  %v34 = vsel %vm29, %v12, 0
  %v37 = vsel %vm29, %v13, 0
  %v40 = vsel %vm29, %v14, 0
  %v43 = vsel %vm29, %v15, 0
  %v46 = vsel %vm29, %v16, 0
  %v49 = vsel %vm29, %v17, 0
  %v52 = vsel %vm29, %v18, 0
  %v55 = vsel %vm29, %v19, 0
  %v58 = vsel %vm29, %v20, 0
  %v61 = vsel %vm29, %v21, 0
  %v64 = vsel %vm29, %v22, 0
  %v67 = vsel %vm29, %v23, 0
  %v70 = vsel %vm29, %v24, 0
  %v73 = vsel %vm29, %v25, 0
  %v76 = vsel %vm29, %v26, 0
  %78 = vmatprep.subr.mxu0 0.0
  %79 = vmatpush1.msra.mxu0 %v27
  %80 = vmatprep.subr.mxu0 0.0
  %81 = vmatpush1.msra.mxu0 %v28
  %82 = vmatprep.subr.mxu0 0.0
  %83 = vmatpush1.msra.mxu0 0.0
  %84 = vmatprep.subr.mxu0 0.0
  %85 = vmatpush1.msra.mxu0 0.0
  %86 = vmatprep.subr.mxu0 0.0
  %87 = vmatpush1.msra.mxu0 0.0
  %88 = vmatprep.subr.mxu0 0.0
  %89 = vmatpush1.msra.mxu0 0.0
  %90 = vmatprep.subr.mxu0 0.0
  %91 = vmatpush1.msra.mxu0 0.0
  %92 = vmatprep.subr.mxu0 0.0
  %93 = vmatpush1.msra.mxu0 0.0
  %94 = vmatprep.subr.mxu0 0.0
  %95 = vmatpush1.msra.mxu0 0.0
  %96 = vmatprep.subr.mxu0 0.0
  %97 = vmatpush1.msra.mxu0 0.0
  %98 = vmatprep.subr.mxu0 0.0
  %99 = vmatpush1.msra.mxu0 0.0
  %100 = vmatprep.subr.mxu0 0.0
  %101 = vmatpush1.msra.mxu0 0.0
  %102 = vmatprep.subr.mxu0 0.0
  %103 = vmatpush1.msra.mxu0 0.0
  %104 = vmatprep.subr.mxu0 0.0
  %105 = vmatpush1.msra.mxu0 0.0
  %106 = vmatprep.subr.mxu0 0.0
  %107 = vmatpush1.msra.mxu0 0.0
  %108 = vmatprep.subr.mxu0 0.0
  %109 = vmatpush1.msra.mxu0 0.0
  %110 = vmatprep.subr.mxu0 0.0
  %111 = vmatpush1.msra.mxu0 0.0
  %112 = vmatprep.subr.mxu0 0.0
  %113 = vmatpush1.msra.mxu0 0.0
  %114 = vmatprep.subr.mxu0 0.0
  %115 = vmatpush1.msra.mxu0 0.0
  %116 = vmatprep.subr.mxu0 0.0
  %117 = vmatpush1.msra.mxu0 0.0
  %118 = vmatprep.subr.mxu0 0.0
  %119 = vmatpush1.msra.mxu0 0.0
  %120 = vmatprep.subr.mxu0 0.0
  %121 = vmatpush1.msra.mxu0 0.0
  %122 = vmatprep.subr.mxu0 0.0
  %123 = vmatpush1.msra.mxu0 0.0
  %124 = vmatprep.subr.mxu0 0.0
  %125 = vmatpush1.msra.mxu0 0.0
  %126 = vmatprep.subr.mxu0 0.0
  %127 = vmatpush1.msra.mxu0 0.0
  %128 = vmatprep.subr.mxu0 0.0
  %129 = vmatpush1.msra.mxu0 0.0
  %130 = vmatprep.subr.mxu0 0.0
  %131 = vmatpush1.msra.mxu0 0.0
  %132 = vmatprep.subr.mxu0 0.0
  %133 = vmatpush1.msra.mxu0 0.0
  %134 = vmatprep.subr.mxu0 0.0
  %135 = vmatpush1.msra.mxu0 0.0
  %136 = vmatprep.subr.mxu0 0.0
  %137 = vmatpush1.msra.mxu0 0.0
  %138 = vmatprep.subr.mxu0 0.0
  %139 = vmatpush1.msra.mxu0 0.0
  %140 = vmatprep.subr.mxu0 0.0
  %141 = vmatpush1.msra.mxu0 0.0
  %142 = vmatprep.mubr.f32.mxu0 0.0
  %143 = vmatmul.mubr.f32.gmra.mrb[0].mxu0 %v31
  %v144 = vpop.f32.mrb[0].mxu0
  %v145 = vadd.f32 0.0, %v144
  %v146 = vpop.f32.mrb[0].mxu0
  %147 = vmatprep.mubr.f32.mxu0 0.0
  %148 = vmatmul.mubr.f32.gmra.mrb[0].mxu0 %v34
  %v149 = vpop.f32.mrb[0].mxu0
  %v150 = vadd.f32 0.0, %v149
  %v151 = vpop.f32.mrb[0].mxu0
  %152 = vmatprep.mubr.f32.mxu0 0.0
  %153 = vmatmul.mubr.f32.gmra.mrb[0].mxu0 %v37
  %v154 = vpop.f32.mrb[0].mxu0
  %v155 = vadd.f32 0.0, %v154
  %v156 = vpop.f32.mrb[0].mxu0
  %157 = vmatprep.mubr.f32.mxu0 0.0
  %158 = vmatmul.mubr.f32.gmra.mrb[0].mxu0 %v40
  %v159 = vpop.f32.mrb[0].mxu0
  %v160 = vadd.f32 0.0, %v159
  %v161 = vpop.f32.mrb[0].mxu0
  %162 = vmatprep.mubr.f32.mxu0 0.0
  %163 = vmatmul.mubr.f32.gmra.mrb[0].mxu0 %v43
  %v164 = vpop.f32.mrb[0].mxu0
  %v165 = vadd.f32 0.0, %v164
  %v166 = vpop.f32.mrb[0].mxu0
  %167 = vmatprep.mubr.f32.mxu0 0.0
  %168 = vmatmul.mubr.f32.gmra.mrb[0].mxu0 %v46
  %v169 = vpop.f32.mrb[0].mxu0
  %v170 = vadd.f32 0.0, %v169
  %v171 = vpop.f32.mrb[0].mxu0
  %172 = vmatprep.mubr.f32.mxu0 0.0
  %173 = vmatmul.mubr.f32.gmra.mrb[0].mxu0 %v49
  %v174 = vpop.f32.mrb[0].mxu0
  %v175 = vadd.f32 0.0, %v174
  %v176 = vpop.f32.mrb[0].mxu0
  %177 = vmatprep.mubr.f32.mxu0 0.0
  %178 = vmatmul.mubr.f32.gmra.mrb[0].mxu0 %v52
  %v179 = vpop.f32.mrb[0].mxu0
  %v180 = vadd.f32 0.0, %v179
  %v181 = vpop.f32.mrb[0].mxu0
  %182 = vmatprep.mubr.f32.mxu0 0.0
  %183 = vmatmul.mubr.f32.gmra.mrb[0].mxu0 %v55
  %v184 = vpop.f32.mrb[0].mxu0
  %v185 = vadd.f32 0.0, %v184
  %v186 = vpop.f32.mrb[0].mxu0
  %187 = vmatprep.mubr.f32.mxu0 0.0
  %188 = vmatmul.mubr.f32.gmra.mrb[0].mxu0 %v58
  %v189 = vpop.f32.mrb[0].mxu0
  %v190 = vadd.f32 0.0, %v189
  %v191 = vpop.f32.mrb[0].mxu0
  %192 = vmatprep.mubr.f32.mxu0 0.0
  %193 = vmatmul.mubr.f32.gmra.mrb[0].mxu0 %v61
  %v194 = vpop.f32.mrb[0].mxu0
  %v195 = vadd.f32 0.0, %v194
  %v196 = vpop.f32.mrb[0].mxu0
  %197 = vmatprep.mubr.f32.mxu0 0.0
  %198 = vmatmul.mubr.f32.gmra.mrb[0].mxu0 %v64
  %v199 = vpop.f32.mrb[0].mxu0
  %v200 = vadd.f32 0.0, %v199
  %v201 = vpop.f32.mrb[0].mxu0
  %202 = vmatprep.mubr.f32.mxu0 0.0
  %203 = vmatmul.mubr.f32.gmra.mrb[0].mxu0 %v67
  %v204 = vpop.f32.mrb[0].mxu0
  %v205 = vadd.f32 0.0, %v204
  %v206 = vpop.f32.mrb[0].mxu0
  %207 = vmatprep.mubr.f32.mxu0 0.0
  %208 = vmatmul.mubr.f32.gmra.mrb[0].mxu0 %v70
  %v209 = vpop.f32.mrb[0].mxu0
  %v210 = vadd.f32 0.0, %v209
  %v211 = vpop.f32.mrb[0].mxu0
  %212 = vmatprep.mubr.f32.mxu0 0.0
  %213 = vmatmul.mubr.f32.gmra.mrb[0].mxu0 %v73
  %v214 = vpop.f32.mrb[0].mxu0
  %v215 = vadd.f32 0.0, %v214
  %v216 = vpop.f32.mrb[0].mxu0
  %217 = vmatprep.mubr.f32.mxu0 0.0
  %218 = vmatmul.mubr.f32.gmra.mrb[0].mxu0 %v76
  %v219 = vpop.f32.mrb[0].mxu0
  %v220 = vadd.f32 0.0, %v219
  %v221 = vpop.f32.mrb[0].mxu0
  %222 = vdwg.mxu0
  %v223 = vadd.f32 %v145, %v150
  %v224 = vadd.f32 %v223, %v155
  %v225 = vadd.f32 %v224, %v160
  %v226 = vadd.f32 %v225, %v165
  %v227 = vadd.f32 %v226, %v170
  %v228 = vadd.f32 %v227, %v175
  %v229 = vadd.f32 %v228, %v180
  %v230 = vadd.f32 %v229, %v185
  %v231 = vadd.f32 %v230, %v190
  %v232 = vadd.f32 %v231, %v195
  %v233 = vadd.f32 %v232, %v200
  %v234 = vadd.f32 %v233, %v205
  %v235 = vadd.f32 %v234, %v210
  %v236 = vadd.f32 %v235, %v215
  %v237 = vadd.f32 %v236, %v220
  %v238 = vrot.slane %v237, 4
  %v239 = vadd.f32 %v237, %v238
  %v240 = vrot.slane %v239, 2
  %v241 = vadd.f32 %v239, %v240
  %v242 = vrot.slane %v241, 1
  %v243 = vadd.f32 %v241, %v242
  %244 = vst [vmem:[%s2] sm:$0x1] %v243
  %v245 = vmul.f32 %v145, %v145
  %v246 = vmul.f32 %v150, %v150
  %v247 = vmul.f32 %v155, %v155
  %v248 = vmul.f32 %v160, %v160
  %v249 = vmul.f32 %v165, %v165
  %v250 = vmul.f32 %v170, %v170
  %v251 = vmul.f32 %v175, %v175
  %v252 = vmul.f32 %v180, %v180
  %v253 = vmul.f32 %v185, %v185
  %v254 = vmul.f32 %v190, %v190
  %v255 = vmul.f32 %v195, %v195
  %v256 = vmul.f32 %v200, %v200
  %v257 = vmul.f32 %v205, %v205
  %v258 = vmul.f32 %v210, %v210
  %v259 = vmul.f32 %v215, %v215
  %v260 = vmul.f32 %v220, %v220
  %v261 = vadd.f32 %v245, %v246
  %v262 = vadd.f32 %v261, %v247
  %v263 = vadd.f32 %v262, %v248
  %v264 = vadd.f32 %v263, %v249
  %v265 = vadd.f32 %v264, %v250
  %v266 = vadd.f32 %v265, %v251
  %v267 = vadd.f32 %v266, %v252
  %v268 = vadd.f32 %v267, %v253
  %v269 = vadd.f32 %v268, %v254
  %v270 = vadd.f32 %v269, %v255
  %v271 = vadd.f32 %v270, %v256
  %v272 = vadd.f32 %v271, %v257
  %v273 = vadd.f32 %v272, %v258
  %v274 = vadd.f32 %v273, %v259
  %v275 = vadd.f32 %v274, %v260
  %v276 = vrot.slane %v275, 4
  %v277 = vadd.f32 %v275, %v276
  %v278 = vrot.slane %v277, 2
  %v279 = vadd.f32 %v277, %v278
  %v280 = vrot.slane %v279, 1
  %v281 = vadd.f32 %v279, %v280
  %282 = vst [vmem:[%s2 + $0x1] sm:$0x1] %v281
  // Predicated region
  $region10: #{preconv_forward.2} parent=0 // pred_check
    _
  $region11: #{preconv_forward.2} parent=0 // pred_check_branch
    %284 = sbr.rel (0) target = $region13
  $region12: #{preconv_forward.2} parent=0 // pred_region
    _
  $region13: #{preconv_forward.2} parent=0 // pred_fallthru
    _
  // Predicated region
  $region14: #{preconv_forward.2} parent=0 // pred_check
    _
  $region15: #{preconv_forward.2} parent=0 // pred_check_branch
    %286 = sbr.rel (0) target = $region17
  $region16: #{preconv_forward.2} parent=0 // pred_region
    _
  $region17: #{preconv_forward.2} parent=0 // pred_fallthru
    _

// kernel: preconv_forward.3
$region0: #{preconv_forward.3}
  #allocation0 [shape = 'u32[]', space=smem, size = 0x4, offset = 0x4, fixed_abs, tag = 'smem constant byte address 0x4 - core index']
  #allocation1 [shape = 'u32[144,128]{1,0:T(1,128)}', space=vmem, size = 0x12000, scoped, tag = 'internal scratch']
  %s0 = inlined_call_operand.vmem [shape: f32[128,16], index: 0, kind: input, shape index: {}]
  %s1 = inlined_call_operand.vmem [shape: f32[16,128], index: 1, kind: input, shape index: {}]
  %s2 = inlined_call_operand.vmem [shape: f32[1,128], index: 2, kind: input, shape index: {}]
  %s3 = inlined_call_operand.vmem [shape: f32[1,128], index: 3, kind: input, shape index: {}]
  %s4 = inlined_call_operand.vmem [shape: f32[128,128], index: 4, kind: output, shape index: {}]
  %s5 = sld [smem:[#allocation0]]
  $region26: #{preconv_forward.3} parent=0
    _
  %s7 = ssub.s32 1, %s5
  %s8 = scalar_select 0, %s7, %s5
  // Predicated region
  $region2: #{preconv_forward.3} parent=0 // pred_check
    _
  $region3: #{preconv_forward.3} parent=0 // pred_check_branch
    %10 = sbr.rel (0) target = $region5
  $region4: #{preconv_forward.3} parent=0 // pred_region
    _
  $region5: #{preconv_forward.3} parent=0 // pred_fallthru
    _
  // Predicated region
  $region6: #{preconv_forward.3} parent=0 // pred_check
    _
  $region7: #{preconv_forward.3} parent=0 // pred_check_branch
    %12 = sbr.rel (0) target = $region9
  $region8: #{preconv_forward.3} parent=0 // pred_region
    _
  $region9: #{preconv_forward.3} parent=0 // pred_fallthru
    _
  // Predicated region
  $region10: #{preconv_forward.3} parent=0 // pred_check
    _
  $region11: #{preconv_forward.3} parent=0 // pred_check_branch
    %14 = sbr.rel (0) target = $region13
  $region12: #{preconv_forward.3} parent=0 // pred_region
    _
  $region13: #{preconv_forward.3} parent=0 // pred_fallthru
    _
  // Predicated region
  $region14: #{preconv_forward.3} parent=0 // pred_check
    _
  $region15: #{preconv_forward.3} parent=0 // pred_check_branch
    %16 = sbr.rel (0) target = $region17
  $region16: #{preconv_forward.3} parent=0 // pred_region
    _
  $region17: #{preconv_forward.3} parent=0 // pred_fallthru
    _
  %v17 = vld [vmem:[%s0] sm:$0xff]
  %v18 = vld [vmem:[%s0 + $0x8] sm:$0xff]
  %v19 = vld [vmem:[%s0 + $0x10] sm:$0xff]
  %v20 = vld [vmem:[%s0 + $0x18] sm:$0xff]
  %v21 = vld [vmem:[%s0 + $0x20] sm:$0xff]
  %v22 = vld [vmem:[%s0 + $0x28] sm:$0xff]
  %v23 = vld [vmem:[%s0 + $0x30] sm:$0xff]
  %v24 = vld [vmem:[%s0 + $0x38] sm:$0xff]
  %v25 = vld [vmem:[%s0 + $0x40] sm:$0xff]
  %v26 = vld [vmem:[%s0 + $0x48] sm:$0xff]
  %v27 = vld [vmem:[%s0 + $0x50] sm:$0xff]
  %v28 = vld [vmem:[%s0 + $0x58] sm:$0xff]
  %v29 = vld [vmem:[%s0 + $0x60] sm:$0xff]
  %v30 = vld [vmem:[%s0 + $0x68] sm:$0xff]
  %v31 = vld [vmem:[%s0 + $0x70] sm:$0xff]
  %v32 = vld [vmem:[%s0 + $0x78] sm:$0xff]
  %v33 = vld [vmem:[%s1] sm:$0xff]
  %v34 = vld [vmem:[%s1 + $0x8] sm:$0xff]
  %vm35 = vcmask 130048
  %v37 = vsel %vm35, %v17, 0
  %v40 = vsel %vm35, %v18, 0
  %v43 = vsel %vm35, %v19, 0
  %v46 = vsel %vm35, %v20, 0
  %v49 = vsel %vm35, %v21, 0
  %v52 = vsel %vm35, %v22, 0
  %v55 = vsel %vm35, %v23, 0
  %v58 = vsel %vm35, %v24, 0
  %v61 = vsel %vm35, %v25, 0
  %v64 = vsel %vm35, %v26, 0
  %v67 = vsel %vm35, %v27, 0
  %v70 = vsel %vm35, %v28, 0
  %v73 = vsel %vm35, %v29, 0
  %v76 = vsel %vm35, %v30, 0
  %v79 = vsel %vm35, %v31, 0
  %v82 = vsel %vm35, %v32, 0
  %84 = vmatprep.subr.mxu0 0.0
  %85 = vmatpush1.msra.mxu0 %v33
  %86 = vmatprep.subr.mxu0 0.0
  %87 = vmatpush1.msra.mxu0 %v34
  %88 = vmatprep.subr.mxu0 0.0
  %89 = vmatpush1.msra.mxu0 0.0
  %90 = vmatprep.subr.mxu0 0.0
  %91 = vmatpush1.msra.mxu0 0.0
  %92 = vmatprep.subr.mxu0 0.0
  %93 = vmatpush1.msra.mxu0 0.0
  %94 = vmatprep.subr.mxu0 0.0
  %95 = vmatpush1.msra.mxu0 0.0
  %96 = vmatprep.subr.mxu0 0.0
  %97 = vmatpush1.msra.mxu0 0.0
  %98 = vmatprep.subr.mxu0 0.0
  %99 = vmatpush1.msra.mxu0 0.0
  %100 = vmatprep.subr.mxu0 0.0
  %101 = vmatpush1.msra.mxu0 0.0
  %102 = vmatprep.subr.mxu0 0.0
  %103 = vmatpush1.msra.mxu0 0.0
  %104 = vmatprep.subr.mxu0 0.0
  %105 = vmatpush1.msra.mxu0 0.0
  %106 = vmatprep.subr.mxu0 0.0
  %107 = vmatpush1.msra.mxu0 0.0
  %108 = vmatprep.subr.mxu0 0.0
  %109 = vmatpush1.msra.mxu0 0.0
  %110 = vmatprep.subr.mxu0 0.0
  %111 = vmatpush1.msra.mxu0 0.0
  %112 = vmatprep.subr.mxu0 0.0
  %113 = vmatpush1.msra.mxu0 0.0
  %114 = vmatprep.subr.mxu0 0.0
  %115 = vmatpush1.msra.mxu0 0.0
  %116 = vmatprep.subr.mxu0 0.0
  %117 = vmatpush1.msra.mxu0 0.0
  %118 = vmatprep.subr.mxu0 0.0
  %119 = vmatpush1.msra.mxu0 0.0
  %120 = vmatprep.subr.mxu0 0.0
  %121 = vmatpush1.msra.mxu0 0.0
  %122 = vmatprep.subr.mxu0 0.0
  %123 = vmatpush1.msra.mxu0 0.0
  %124 = vmatprep.subr.mxu0 0.0
  %125 = vmatpush1.msra.mxu0 0.0
  %126 = vmatprep.subr.mxu0 0.0
  %127 = vmatpush1.msra.mxu0 0.0
  %128 = vmatprep.subr.mxu0 0.0
  %129 = vmatpush1.msra.mxu0 0.0
  %130 = vmatprep.subr.mxu0 0.0
  %131 = vmatpush1.msra.mxu0 0.0
  %132 = vmatprep.subr.mxu0 0.0
  %133 = vmatpush1.msra.mxu0 0.0
  %134 = vmatprep.subr.mxu0 0.0
  %135 = vmatpush1.msra.mxu0 0.0
  %136 = vmatprep.subr.mxu0 0.0
  %137 = vmatpush1.msra.mxu0 0.0
  %138 = vmatprep.subr.mxu0 0.0
  %139 = vmatpush1.msra.mxu0 0.0
  %140 = vmatprep.subr.mxu0 0.0
  %141 = vmatpush1.msra.mxu0 0.0
  %142 = vmatprep.subr.mxu0 0.0
  %143 = vmatpush1.msra.mxu0 0.0
  %144 = vmatprep.subr.mxu0 0.0
  %145 = vmatpush1.msra.mxu0 0.0
  %146 = vmatprep.subr.mxu0 0.0
  %147 = vmatpush1.msra.mxu0 0.0
  %148 = vmatprep.mubr.f32.mxu0 0.0
  %149 = vmatmul.mubr.f32.gmra.mrb[0].mxu0 %v37
  %v150 = vpop.f32.mrb[0].mxu0
  %v151 = vadd.f32 0.0, %v150
  %v152 = vpop.f32.mrb[0].mxu0
  %153 = vmatprep.mubr.f32.mxu0 0.0
  %154 = vmatmul.mubr.f32.gmra.mrb[0].mxu0 %v40
  %v155 = vpop.f32.mrb[0].mxu0
  %v156 = vadd.f32 0.0, %v155
  %v157 = vpop.f32.mrb[0].mxu0
  %158 = vmatprep.mubr.f32.mxu0 0.0
  %159 = vmatmul.mubr.f32.gmra.mrb[0].mxu0 %v43
  %v160 = vpop.f32.mrb[0].mxu0
  %v161 = vadd.f32 0.0, %v160
  %v162 = vpop.f32.mrb[0].mxu0
  %163 = vmatprep.mubr.f32.mxu0 0.0
  %164 = vmatmul.mubr.f32.gmra.mrb[0].mxu0 %v46
  %v165 = vpop.f32.mrb[0].mxu0
  %v166 = vadd.f32 0.0, %v165
  %v167 = vpop.f32.mrb[0].mxu0
  %168 = vmatprep.mubr.f32.mxu0 0.0
  %169 = vmatmul.mubr.f32.gmra.mrb[0].mxu0 %v49
  %v170 = vpop.f32.mrb[0].mxu0
  %v171 = vadd.f32 0.0, %v170
  %v172 = vpop.f32.mrb[0].mxu0
  %173 = vmatprep.mubr.f32.mxu0 0.0
  %174 = vmatmul.mubr.f32.gmra.mrb[0].mxu0 %v52
  %v175 = vpop.f32.mrb[0].mxu0
  %v176 = vadd.f32 0.0, %v175
  %v177 = vpop.f32.mrb[0].mxu0
  %178 = vmatprep.mubr.f32.mxu0 0.0
  %179 = vmatmul.mubr.f32.gmra.mrb[0].mxu0 %v55
  %v180 = vpop.f32.mrb[0].mxu0
  %v181 = vadd.f32 0.0, %v180
  %v182 = vpop.f32.mrb[0].mxu0
  %183 = vmatprep.mubr.f32.mxu0 0.0
  %184 = vmatmul.mubr.f32.gmra.mrb[0].mxu0 %v58
  %v185 = vpop.f32.mrb[0].mxu0
  %v186 = vadd.f32 0.0, %v185
  %v187 = vpop.f32.mrb[0].mxu0
  %188 = vmatprep.mubr.f32.mxu0 0.0
  %189 = vmatmul.mubr.f32.gmra.mrb[0].mxu0 %v61
  %v190 = vpop.f32.mrb[0].mxu0
  %v191 = vadd.f32 0.0, %v190
  %v192 = vpop.f32.mrb[0].mxu0
  %193 = vmatprep.mubr.f32.mxu0 0.0
  %194 = vmatmul.mubr.f32.gmra.mrb[0].mxu0 %v64
  %v195 = vpop.f32.mrb[0].mxu0
  %v196 = vadd.f32 0.0, %v195
  %v197 = vpop.f32.mrb[0].mxu0
  %198 = vmatprep.mubr.f32.mxu0 0.0
  %199 = vmatmul.mubr.f32.gmra.mrb[0].mxu0 %v67
  %v200 = vpop.f32.mrb[0].mxu0
  %v201 = vadd.f32 0.0, %v200
  %v202 = vpop.f32.mrb[0].mxu0
  %203 = vmatprep.mubr.f32.mxu0 0.0
  %204 = vmatmul.mubr.f32.gmra.mrb[0].mxu0 %v70
  %v205 = vpop.f32.mrb[0].mxu0
  %v206 = vadd.f32 0.0, %v205
  %v207 = vpop.f32.mrb[0].mxu0
  %208 = vmatprep.mubr.f32.mxu0 0.0
  %209 = vmatmul.mubr.f32.gmra.mrb[0].mxu0 %v73
  %v210 = vpop.f32.mrb[0].mxu0
  %v211 = vadd.f32 0.0, %v210
  %v212 = vpop.f32.mrb[0].mxu0
  %213 = vmatprep.mubr.f32.mxu0 0.0
  %214 = vmatmul.mubr.f32.gmra.mrb[0].mxu0 %v76
  %v215 = vpop.f32.mrb[0].mxu0
  %v216 = vadd.f32 0.0, %v215
  %v217 = vpop.f32.mrb[0].mxu0
  %218 = vmatprep.mubr.f32.mxu0 0.0
  %219 = vmatmul.mubr.f32.gmra.mrb[0].mxu0 %v79
  %v220 = vpop.f32.mrb[0].mxu0
  %v221 = vadd.f32 0.0, %v220
  %v222 = vpop.f32.mrb[0].mxu0
  %223 = vmatprep.mubr.f32.mxu0 0.0
  %224 = vmatmul.mubr.f32.gmra.mrb[0].mxu0 %v82
  %v225 = vpop.f32.mrb[0].mxu0
  %v226 = vadd.f32 0.0, %v225
  %v227 = vpop.f32.mrb[0].mxu0
  %228 = vdwg.mxu0
  %v229 = vld [vmem:[%s2] sm:$0x1]
  %v231 = vlaneseq
  %v232 = vshrl.u32 %v231, 7
  %v233 = vsub.s32 0, %v232
  %v234 = vrot.slane %v229, %v233
  %v236 = vmul.f32 %v151, %v234
  %v237 = vmul.f32 %v156, %v234
  %v238 = vmul.f32 %v161, %v234
  %v239 = vmul.f32 %v166, %v234
  %v240 = vmul.f32 %v171, %v234
  %v241 = vmul.f32 %v176, %v234
  %v242 = vmul.f32 %v181, %v234
  %v243 = vmul.f32 %v186, %v234
  %v244 = vmul.f32 %v191, %v234
  %v245 = vmul.f32 %v196, %v234
  %v246 = vmul.f32 %v201, %v234
  %v247 = vmul.f32 %v206, %v234
  %v248 = vmul.f32 %v211, %v234
  %v249 = vmul.f32 %v216, %v234
  %v250 = vmul.f32 %v221, %v234
  %v251 = vmul.f32 %v226, %v234
  %v252 = vld [vmem:[%s3] sm:$0x1]
  %v254 = vlaneseq
  %v255 = vshrl.u32 %v254, 7
  %v256 = vsub.s32 0, %v255
  %v257 = vrot.slane %v252, %v256
  %v259 = vadd.f32 %v236, %v257
  %v260 = vadd.f32 %v237, %v257
  %v261 = vadd.f32 %v238, %v257
  %v262 = vadd.f32 %v239, %v257
  %v263 = vadd.f32 %v240, %v257
  %v264 = vadd.f32 %v241, %v257
  %v265 = vadd.f32 %v242, %v257
  %v266 = vadd.f32 %v243, %v257
  %v267 = vadd.f32 %v244, %v257
  %v268 = vadd.f32 %v245, %v257
  %v269 = vadd.f32 %v246, %v257
  %v270 = vadd.f32 %v247, %v257
  %v271 = vadd.f32 %v248, %v257
  %v272 = vadd.f32 %v249, %v257
  %v273 = vadd.f32 %v250, %v257
  %v274 = vadd.f32 %v251, %v257
  %v275 = vmax.f32 %v259, 0.0
  %v276 = vmax.f32 %v260, 0.0
  %v277 = vmax.f32 %v261, 0.0
  %v278 = vmax.f32 %v262, 0.0
  %v279 = vmax.f32 %v263, 0.0
  %v280 = vmax.f32 %v264, 0.0
  %v281 = vmax.f32 %v265, 0.0
  %v282 = vmax.f32 %v266, 0.0
  %v283 = vmax.f32 %v267, 0.0
  %v284 = vmax.f32 %v268, 0.0
  %v285 = vmax.f32 %v269, 0.0
  %v286 = vmax.f32 %v270, 0.0
  %v287 = vmax.f32 %v271, 0.0
  %v288 = vmax.f32 %v272, 0.0
  %v289 = vmax.f32 %v273, 0.0
  %v290 = vmax.f32 %v274, 0.0
  %291 = vst [vmem:[%s4] sm:$0xff] %v275
  %292 = vst [vmem:[%s4 + $0x8] sm:$0xff] %v276
  %293 = vst [vmem:[%s4 + $0x10] sm:$0xff] %v277
  %294 = vst [vmem:[%s4 + $0x18] sm:$0xff] %v278
  %295 = vst [vmem:[%s4 + $0x20] sm:$0xff] %v279
  %296 = vst [vmem:[%s4 + $0x28] sm:$0xff] %v280
  %297 = vst [vmem:[%s4 + $0x30] sm:$0xff] %v281
  %298 = vst [vmem:[%s4 + $0x38] sm:$0xff] %v282
  %299 = vst [vmem:[%s4 + $0x40] sm:$0xff] %v283
  %300 = vst [vmem:[%s4 + $0x48] sm:$0xff] %v284
  %301 = vst [vmem:[%s4 + $0x50] sm:$0xff] %v285
  %302 = vst [vmem:[%s4 + $0x58] sm:$0xff] %v286
  %303 = vst [vmem:[%s4 + $0x60] sm:$0xff] %v287
  %304 = vst [vmem:[%s4 + $0x68] sm:$0xff] %v288
  %305 = vst [vmem:[%s4 + $0x70] sm:$0xff] %v289
  %306 = vst [vmem:[%s4 + $0x78] sm:$0xff] %v290
  // Predicated region
  $region18: #{preconv_forward.3} parent=0 // pred_check
    _
  $region19: #{preconv_forward.3} parent=0 // pred_check_branch
    %308 = sbr.rel (0) target = $region21
  $region20: #{preconv_forward.3} parent=0 // pred_region
    _
  $region21: #{preconv_forward.3} parent=0 // pred_fallthru
    _
  // Predicated region
  $region22: #{preconv_forward.3} parent=0 // pred_check
    _
  $region23: #{preconv_forward.3} parent=0 // pred_check_branch
    %310 = sbr.rel (0) target = $region25
  $region24: #{preconv_forward.3} parent=0 // pred_region
    _
  $region25: #{preconv_forward.3} parent=0 // pred_fallthru
    _

</llo_original>
